<compile_context>
chip_gen: v5e
topology: v5e:2x2
jax: 0.10.0
libtpu: 0.0.40
codegen_flags: <defaults>
</compile_context>

<pallas_src>
import functools
import math

import jax
import jax.numpy as jnp
from jax.experimental import pallas as pl
from jax.experimental.pallas import tpu as pltpu


def _round_up(n, m):
    return ((n + m - 1) // m) * m


def _layernorm_kernel(x_ref, o_ref, *, eps):
    # x_ref / o_ref: (tile_rows, d_model) tiles in VMEM.
    x = x_ref[...].astype(jnp.float32)
    mean = jnp.mean(x, axis=-1, keepdims=True)
    centered = x - mean
    var = jnp.mean(centered * centered, axis=-1, keepdims=True)  # unbiased=False
    inv = jax.lax.rsqrt(var + eps)
    o_ref[...] = (centered * inv).astype(o_ref.dtype)


def _layernorm_folded_kernel(x_ref, o_ref, *, eps, d_model, fold):
    # Lane-dense path for d_model < 128: each VMEM row packs `fold` logical
    # rows back to back (fold * d_model is a multiple of 128), so loads and
    # stores use full 128-lane vregs (no vst.msk).  Per-logical-row mean/var
    # become segmented reductions over lane groups, computed with MXU matmuls
    # against a constant block-diagonal averaging matrix (entries 1/d_model).
    fd = fold * d_model
    x = x_ref[...].astype(jnp.float32)                           # (tile_rows, fd)
    seg_r = jax.lax.broadcasted_iota(jnp.int32, (fd, fd), 0) // d_model
    seg_c = jax.lax.broadcasted_iota(jnp.int32, (fd, fd), 1) // d_model
    avg = (seg_r == seg_c).astype(jnp.float32) * jnp.float32(1.0 / d_model)
    hi = jax.lax.Precision.HIGHEST  # keep near-f32 accuracy for mean/var
    mean = jnp.dot(x, avg, precision=hi, preferred_element_type=jnp.float32)
    centered = x - mean
    var = jnp.dot(centered * centered, avg, precision=hi,
                  preferred_element_type=jnp.float32)
    o_ref[...] = (centered * jax.lax.rsqrt(var + eps)).astype(o_ref.dtype)


def _tpu_budgets():
    """Generation-aware (target tile bytes, VMEM limit), keyed off physical VMEM."""
    vmem_physical = None
    try:
        info = pltpu.get_tpu_info()
        vmem_physical = int(getattr(info, "vmem_capacity_bytes", 0)) or None
    except Exception:
        vmem_physical = None  # query unavailable -> conservative fallback
    if vmem_physical is None or vmem_physical <= (64 << 20):
        # v7x-class: 64 MiB VMEM per TC -> tighter cap with headroom for
        # Mosaic internal scratch; HBM ~3.2 TB/s so big per-step tiles pay off.
        return 8 << 20, 46 << 20
    # v5e / v6e: 128 MiB physical VMEM.
    return 8 << 20, 96 << 20


def _choose_tile_rows(rows, row_width, itemsize, target_tile_bytes, vmem_budget):
    # Mem-bound kernel: each grid step should move several MiB (counted in the
    # NATIVE dtype) so the ~0.35us fixed per-step cost is negligible, subject
    # to the VMEM budget (2x double-buffered in + 2x out in native dtype plus
    # ~3 full-tile f32 temporaries) and keeping >= ~8 grid steps on large
    # inputs for v7x megacore.  Row dim stays a multiple of 8 (sublanes).
    padded_rows = _round_up(rows, 8)
    row_native = row_width * itemsize
    row_vmem = 4 * row_native + 3 * row_width * 4

    t = target_tile_bytes // max(row_native, 1)
    t = min(t, (vmem_budget - (4 << 20)) // max(row_vmem, 1))
    t = max(8, (t // 8) * 8)
    t = min(t, padded_rows)

    # Keep at least ~8 grid steps when there is enough work (megacore sharding).
    min_steps = 8
    per_step = ((padded_rows // min_steps) // 8) * 8
    if per_step >= 64:
        t = min(t, per_step)
    return max(8, t)


def layer_norm(x, eps=1e-12, tile_rows=None):
    """LayerNorm over the last axis, no scale/bias (matches the torch module)."""
    orig_shape = x.shape
    d_model = orig_shape[-1]
    rows = 1
    for s in orig_shape[:-1]:
        rows *= s

    itemsize = jnp.dtype(x.dtype).itemsize
    target_tile_bytes, vmem_budget = _tpu_budgets()

    # Lane-dense fold for narrow d_model (< 128): pack `fold` logical rows
    # into the lane axis so the stored last dim is a multiple of 128.
    fold = 1
    if 0 < d_model < 128:
        g = 128 // math.gcd(d_model, 128)
        if g > 1 and rows % g == 0 and rows // g >= 8 and g * d_model <= 512:
            fold = g
    # TODO(synk): rows not divisible by the fold factor (or huge fold factors
    # for odd d_model) still fall back to the masked-store path below.

    work_rows = rows // fold
    work_cols = fold * d_model
    x2 = x.reshape(work_rows, work_cols)

    if fold > 1:
        kernel = functools.partial(
            _layernorm_folded_kernel, eps=eps, d_model=d_model, fold=fold)
    else:
        kernel = functools.partial(_layernorm_kernel, eps=eps)

    if tile_rows is None:
        tile_rows = _choose_tile_rows(
            work_rows, work_cols, itemsize, target_tile_bytes, vmem_budget)
    else:
        t = max(1, int(tile_rows) // fold)   # user value is in original rows
        tile_rows = max(8, (t // 8) * 8)
        tile_rows = min(tile_rows, _round_up(work_rows, 8))

    tile_native = tile_rows * work_cols * itemsize
    tile_f32 = tile_rows * work_cols * 4
    # 2x double-buffered input + 2x double-buffered output (native dtype) plus
    # ~3 full-tile f32 temporaries and fixed headroom, clamped to the
    # generation-aware VMEM budget.
    vmem_bytes = 4 * tile_native + 3 * tile_f32 + (4 << 20)
    vmem_bytes = int(min(max(vmem_bytes, 32 << 20), vmem_budget))

    grid = (pl.cdiv(work_rows, tile_rows),)

    # Rows are independent, so the padded garbage rows of a partial tail block
    # are computed on but never stored (masked writeback).
    out = pl.pallas_call(
        kernel,
        out_shape=jax.ShapeDtypeStruct((work_rows, work_cols), x.dtype),
        grid_spec=pltpu.PrefetchScalarGridSpec(
            num_scalar_prefetch=0,
            grid=grid,
            in_specs=[pl.BlockSpec((tile_rows, work_cols), lambda i: (i, 0))],
            out_specs=pl.BlockSpec((tile_rows, work_cols), lambda i: (i, 0)),
        ),
        compiler_params=pltpu.CompilerParams(
            dimension_semantics=("parallel",),
            vmem_limit_bytes=vmem_bytes,
        ),
    )(x2)

    return out.reshape(orig_shape)


if __name__ == "__main__":
    def ref_ln(x, eps=1e-12):
        x32 = x.astype(jnp.float32)
        mean = jnp.mean(x32, axis=-1, keepdims=True)
        var = jnp.mean((x32 - mean) ** 2, axis=-1, keepdims=True)
        return ((x32 - mean) / jnp.sqrt(var + eps)).astype(x.dtype)

    # Small transformer-ish shape: (batch=2, seq=8, d_model=32).  Too few rows
    # to fold -> exercises the plain (non-folded) path, single grid step.
    x = jax.random.normal(jax.random.PRNGKey(0), (2, 8, 32), dtype=jnp.float32)
    y = jax.block_until_ready(layer_norm(x, eps=1e-12))
    assert y.shape == x.shape and y.dtype == x.dtype
    assert jnp.allclose(y, ref_ln(x), atol=1e-5, rtol=1e-5)

    # Ragged row count + explicit small tile -> multi-step grid with a partial
    # final block (exercises Pallas' masked writeback of the tail tile).
    x2 = jax.random.normal(jax.random.PRNGKey(1), (3, 50, 32), dtype=jnp.float32)
    y2 = jax.block_until_ready(layer_norm(x2, eps=1e-12, tile_rows=64))
    assert y2.shape == x2.shape and y2.dtype == x2.dtype
    assert jnp.allclose(y2, ref_ln(x2), atol=1e-5, rtol=1e-5)

    # Row count divisible by the fold factor -> exercises the lane-dense
    # folded path for d_model < 128 (segmented MXU mean/var reductions).
    x3 = jax.random.normal(jax.random.PRNGKey(2), (4, 16, 32), dtype=jnp.float32)
    y3 = jax.block_until_ready(layer_norm(x3, eps=1e-12))
    assert y3.shape == x3.shape and y3.dtype == x3.dtype
    # Slightly looser tolerance: the segmented reductions run on the MXU.
    assert jnp.allclose(y3, ref_ln(x3), atol=1e-4, rtol=1e-4)

    print("KERNEL_OK")
</pallas_src>

<mosaic_0001>
module attributes {stable_mosaic.version = 11 : i64} {
  func.func @_layernorm_kernel(%arg0: i32, %arg1: memref<16x32xf32, #tpu.memory_space<vmem>>, %arg2: memref<16x32xf32, #tpu.memory_space<vmem>>) attributes {dimension_semantics = [#tpu.dimension_semantics<parallel>], iteration_bounds = array<i64: 1>, scalar_prefetch = 0 : i64, scratch_operands = 0 : i64, tpu.core_type = #tpu.core_type<tc>, window_params = [{transform_indices = @transform_0, window_bounds = array<i64: 16, 32>}, {transform_indices = @transform_1, window_bounds = array<i64: 16, 32>}]} {
    %c0 = arith.constant 0 : index
    %c0_0 = arith.constant 0 : index
    %0 = vector.load %arg1[%c0, %c0_0] : memref<16x32xf32, #tpu.memory_space<vmem>>, vector<16x32xf32>
    %cst = arith.constant dense<0.000000e+00> : vector<16xf32>
    %1 = vector.multi_reduction <add>, %0, %cst [1] : vector<16x32xf32> to vector<16xf32>
    %2 = vector.shape_cast %1 : vector<16xf32> to vector<16x1xf32>
    %cst_1 = arith.constant 3.200000e+01 : f32
    %3 = vector.broadcast %cst_1 : f32 to vector<16x1xf32>
    %4 = arith.divf %2, %3 : vector<16x1xf32>
    %5 = vector.broadcast %4 : vector<16x1xf32> to vector<16x32xf32>
    %6 = arith.subf %0, %5 : vector<16x32xf32>
    %7 = arith.mulf %6, %6 : vector<16x32xf32>
    %cst_2 = arith.constant dense<0.000000e+00> : vector<16xf32>
    %8 = vector.multi_reduction <add>, %7, %cst_2 [1] : vector<16x32xf32> to vector<16xf32>
    %9 = vector.shape_cast %8 : vector<16xf32> to vector<16x1xf32>
    %cst_3 = arith.constant 3.200000e+01 : f32
    %10 = vector.broadcast %cst_3 : f32 to vector<16x1xf32>
    %11 = arith.divf %9, %10 : vector<16x1xf32>
    %cst_4 = arith.constant 9.99999996E-13 : f32
    %12 = vector.broadcast %cst_4 : f32 to vector<16x1xf32>
    %13 = arith.addf %11, %12 : vector<16x1xf32>
    %14 = math.rsqrt %13 : vector<16x1xf32>
    %15 = vector.broadcast %14 : vector<16x1xf32> to vector<16x32xf32>
    %16 = arith.mulf %6, %15 : vector<16x32xf32>
    %c0_5 = arith.constant 0 : index
    %c0_6 = arith.constant 0 : index
    %17 = vector.load %arg2[%c0_5, %c0_6] : memref<16x32xf32, #tpu.memory_space<vmem>>, vector<16x32xf32>
    tpu.vector_store %arg2[%c0_5, %c0_6], %16 {strides = array<i32>} : memref<16x32xf32, #tpu.memory_space<vmem>>, vector<16x32xf32>,
    return
  }
  func.func @transform_0(%arg0: i32) -> (i32, i32) {
    %c0_i32 = arith.constant 0 : i32
    %c0_i32_0 = arith.constant 0 : i32
    return %arg0, %c0_i32 : i32, i32
  }
  func.func @transform_1(%arg0: i32) -> (i32, i32) {
    %c0_i32 = arith.constant 0 : i32
    %c0_i32_0 = arith.constant 0 : i32
    return %arg0, %c0_i32 : i32, i32
  }
}

</mosaic_0001>

<llo_original>
// kernel: tpu_custom_call.1
$region0: #{tpu_custom_call.1}
  #allocation0 [shape = 'u32[]', space=smem, size = 0x4, offset = 0x4, fixed_abs, tag = 'smem constant byte address 0x4 - core index']
  #allocation1 [shape = 'u32[72,128]{1,0:T(1,128)}', space=vmem, size = 0x9000, scoped, tag = 'internal scratch']
  %s0 = inlined_call_operand.hbm [shape: f32[16,32], index: 0, kind: input, shape index: {}]
  %s1 = inlined_call_operand.hbm [shape: f32[16,32], index: 1, kind: output, shape index: {}]
  %s2 = sld [smem:[#allocation0]]
  $region18: #{tpu_custom_call.1} parent=0
    _
  %s4 = ssub.s32 1, %s2
  %s5 = scalar_select 0, %s4, %s2
  $region1: #{tpu_custom_call.1} parent=0
    #allocation2 [shape = 'u8[8192]{0}', space=vmem, size = 0x2000, scoped, tag = 'input window, operand 0, single buffered']
    #allocation3 [shape = 's32[1]{0}', space=sflag, size = 0x4, scoped, tag = 'scoped memory for tpu_custom_call.1']
    #allocation4 [shape = 's32[1]{0}', space=sflag, size = 0x4, scoped, tag = 'scoped memory for tpu_custom_call.1']
    #allocation5 [shape = 'u8[8192]{0}', space=vmem, size = 0x2000, scoped, tag = 'output window, operand 0, single buffered']
    %6 = vsyncpa [#allocation3], 0
    %7 = vsyncpa [#allocation4], 0
    // Predicated region
    $region2: #{tpu_custom_call.1} parent=1 // pred_check
      _
    $region3: #{tpu_custom_call.1} parent=1 // pred_check_branch
      %9 = sbr.rel (0) target = $region5
    $region4: #{tpu_custom_call.1} parent=1 // pred_region
      %11 = vsyncadd [#allocation3], 0
      %s12 = sshll.u32 %s0, 4
      %s13 = int_to_ptr.hbm [resolvable:$true] %s12
      %s14 = sshll.u32 [#allocation2], 4
      %s15 = int_to_ptr.vmem [resolvable:$true] %s14
      %20 = dma.hbm_to_vmem [thread:$0]  %s13, 256, %s15, [#allocation3], 128, 128, 8
    $region5: #{tpu_custom_call.1} parent=1 // pred_fallthru
      _
    // Predicated region
    $region6: #{tpu_custom_call.1} parent=1 // pred_check
      _
    $region7: #{tpu_custom_call.1} parent=1 // pred_check_branch
      %22 = sbr.rel (0) target = $region9
    $region8: #{tpu_custom_call.1} parent=1 // pred_region
      %24 = dma.done [#allocation3], 256
    $region9: #{tpu_custom_call.1} parent=1 // pred_fallthru
      _
    %v25 = vld [vmem:[#allocation2] sm:$0xff]
    %v26 = vld [vmem:[#allocation2 + $0x8] sm:$0xff]
    %vm27 = vcmask 261120
    %v28 = vsel %vm27, %v25, 0.0
    %29 = vadd.xlane.f32.xlu0 %v28
    %v30 = vpop.xlane.xlu0 %29
    %v31 = vsel %vm27, %v26, 0.0
    %32 = vadd.xlane.f32.xlu0 %v31
    %v33 = vpop.xlane.xlu0 %32
    %v34 = vrcp.pop 32.0
    %v35 = vmul.f32 32.0, %v34
    %v36 = vsub.f32 1.0, %v35
    %v37 = vmul.f32 %v34, %v36
    %v38 = vadd.f32 %v34, %v37
    %vm39 = vweird.f32 %v34
    %v40 = vsel %vm39, %v34, %v38
    %v41 = vmul.f32 %v30, %v40
    %v42 = vmul.f32 %v33, %v40
    %v43 = vsub.f32 %v25, %v41
    %v44 = vsub.f32 %v26, %v42
    %v45 = vmul.f32 %v43, %v43
    %v46 = vmul.f32 %v44, %v44
    %v47 = vsel %vm27, %v45, 0.0
    %48 = vadd.xlane.f32.xlu0 %v47
    %v49 = vpop.xlane.xlu0 %48
    %v50 = vsel %vm27, %v46, 0.0
    %51 = vadd.xlane.f32.xlu0 %v50
    %v52 = vpop.xlane.xlu0 %51
    %v53 = vmul.f32 %v49, %v40
    %v54 = vmul.f32 %v52, %v40
    %v55 = vadd.f32 %v53, 1e-12
    %v56 = vadd.f32 %v54, 1e-12
    %v57 = vrsqrt.pop %v55
    %v58 = vmul.f32 %v57, %v55
    %v59 = vmul.f32 %v58, %v57
    %v60 = vmul.f32 0.5, %v59
    %v61 = vsub.f32 1.5, %v60
    %v62 = vmul.f32 %v57, %v61
    %vm63 = vweird.f32 %v55
    %vm64 = vweird.f32 %v57
    %vm65 = vmor %vm63, %vm64
    %v66 = vsel %vm65, %v57, %v62
    %v67 = vrsqrt.pop %v56
    %v68 = vmul.f32 %v67, %v56
    %v69 = vmul.f32 %v68, %v67
    %v70 = vmul.f32 0.5, %v69
    %v71 = vsub.f32 1.5, %v70
    %v72 = vmul.f32 %v67, %v71
    %vm73 = vweird.f32 %v56
    %vm74 = vweird.f32 %v67
    %vm75 = vmor %vm73, %vm74
    %v76 = vsel %vm75, %v67, %v72
    %v77 = vmul.f32 %v43, %v66
    %v78 = vmul.f32 %v44, %v76
    %79 = vst.msk [vmem:[#allocation5] sm:$0xff] %vm27, %v77
    %80 = vst.msk [vmem:[#allocation5 + $0x8] sm:$0xff] %vm27, %v78
    // Predicated region
    $region10: #{tpu_custom_call.1} parent=1 // pred_check
      _
    $region11: #{tpu_custom_call.1} parent=1 // pred_check_branch
      %82 = sbr.rel (0) target = $region13
    $region12: #{tpu_custom_call.1} parent=1 // pred_region
      %84 = vsyncadd [#allocation4], 0
      %s85 = sshll.u32 [#allocation5], 4
      %s86 = int_to_ptr.vmem [resolvable:$true] %s85
      %s87 = sshll.u32 %s1, 4
      %s88 = int_to_ptr.hbm [resolvable:$true] %s87
      %93 = dma.vmem_to_hbm [thread:$0]  %s86, 256, %s88, [#allocation4], 128, 128, 8
    $region13: #{tpu_custom_call.1} parent=1 // pred_fallthru
      _
    // Predicated region
    $region14: #{tpu_custom_call.1} parent=1 // pred_check
      _
    $region15: #{tpu_custom_call.1} parent=1 // pred_check_branch
      %95 = sbr.rel (0) target = $region17
    $region16: #{tpu_custom_call.1} parent=1 // pred_region
      %97 = dma.done [#allocation4], 256
    $region17: #{tpu_custom_call.1} parent=1 // pred_fallthru
      _
    %98 = vsyncpa [#allocation3], 1
    %99 = vsyncpa [#allocation4], 1

</llo_original>
